<compile_context>
chip_gen: v6e
topology: v6e:2x2x1
jax: 0.10.0
libtpu: 0.0.40
codegen_flags: <defaults>
</compile_context>

<pallas_src>
import functools
import math

import jax
import jax.numpy as jnp
from jax.experimental import pallas as pl
from jax.experimental.pallas import tpu as pltpu


def _round_up(x, m):
    return ((x + m - 1) // m) * m


def _tpu_defaults():
    """(tensorcores_per_chip, target input-block bytes) by TPU generation."""
    kind = ""
    try:
        kind = (jax.devices()[0].device_kind or "").lower()
    except Exception:
        pass
    if ("v7" in kind) or ("tpu7" in kind) or ("7x" in kind):
        return 2, 8 << 20      # v7x: 2 TCs/chip, ~3.2 TB/s HBM, 64 MiB VMEM/TC
    if "v6" in kind:
        return 1, 4 << 20      # v6e: 1 TC, ample VMEM
    return 1, 2 << 20          # v5e / unknown: conservative


def _label_smoothing_kernel(x_ref, tgt_ref, out_ref, *, smoothing, padding_idx):
    i = pl.program_id(1)       # row-tile within chunk (reduction / 'arbitrary' axis)

    @pl.when(i == 0)
    def _():
        out_ref[...] = jnp.zeros_like(out_ref)

    x = x_ref[...]             # (tn, V) log-probs, kept in input dtype (no full-tile upcast)
    tgt = tgt_ref[...]         # (tn, 1) int32; -1 marks rows added by padding
    tn, V = x.shape

    # Static per-row entropy constants (smoothing is a Python float).
    base = smoothing / (V - 1)
    confidence = 1.0 - smoothing
    blogb = base * math.log(base) if base > 0.0 else 0.0
    clogc = confidence * math.log(confidence) if confidence > 0.0 else 0.0
    ent_nonpad = (V - 2) * blogb + clogc        # target != padding_idx
    ent_pad = (V - 1) * blogb                   # target == padding_idx

    # Row sums on the otherwise-idle MXU (frees the VALU slot), f32 accumulation.
    ones_rhs = jnp.ones((V, 128), dtype=x.dtype)            # splat constant (free)
    row_sum = jnp.dot(x, ones_rhs, preferred_element_type=jnp.float32)[:, 0:1]

    # x[i, target[i]] via compare/select in the input dtype (exactly one nonzero
    # per row, so the narrow-dtype sum is exact); upcast only the (tn,1) column.
    col = jax.lax.broadcasted_iota(jnp.int32, (tn, V), 1)
    x_tgt = jnp.sum(jnp.where(col == tgt, x, jnp.zeros_like(x)),
                    axis=1, keepdims=True).astype(jnp.float32)
    x_pad = x[:, padding_idx:padding_idx + 1].astype(jnp.float32)   # static lane slice

    is_pad = tgt == padding_idx
    cross = base * row_sum - base * x_pad + jnp.where(
        is_pad, 0.0, (confidence - base) * x_tgt)
    ent = jnp.where(tgt < 0, 0.0,
                    jnp.where(is_pad, jnp.float32(ent_pad), jnp.float32(ent_nonpad)))
    # Padded rows: x rows are zero-filled -> cross == 0; ent == 0 via the -1 sentinel.

    # Output block stays VMEM-resident across the 'arbitrary' axis (accumulator);
    # the tiny (C*tile_n)-element final reduce happens in the wrapper.
    out_ref[...] += (ent - cross)[None, :, :]


def label_smoothing_loss(model_output, target, *, padding_idx, smoothing,
                         tile_n=None, num_chunks=None):
    """model_output: (N, V) f32/bf16 log-probs; target: (N,) int. Returns scalar f32."""
    N, V = model_output.shape
    bpe = jnp.dtype(model_output.dtype).itemsize

    n_cores, block_target = _tpu_defaults()
    if num_chunks is None:
        num_chunks = n_cores

    # Min sublane-tile alignment per dtype width (bf16 needs 16-row tiles).
    row_align = 8 if bpe >= 4 else (16 if bpe == 2 else 32)

    if tile_n is None:
        # Size tiles purely by block bytes (no small row cap); cap at 4096 rows
        # to bound the lane-padded vreg footprint for tiny-V inputs.
        tile_n = block_target // max(V * bpe, 1)
        tile_n = min(4096, tile_n)
    tile_n = max(row_align, (int(tile_n) // row_align) * row_align)
    tile_n = min(tile_n, _round_up(N, row_align))

    C = int(max(1, num_chunks))
    if C > 1 and pl.cdiv(N, tile_n) < C:
        C = 1                                   # small N: don't pad a whole extra chunk

    super_rows = C * tile_n
    N_padded = _round_up(N, super_rows)
    T = N_padded // super_rows

    x = model_output
    tgt = target.astype(jnp.int32)
    if N_padded != N:
        x = jnp.pad(x, ((0, N_padded - N), (0, 0)))
        tgt = jnp.pad(tgt, (0, N_padded - N), constant_values=-1)   # sentinel rows
    tgt2d = tgt.reshape(N_padded, 1)

    kernel = functools.partial(_label_smoothing_kernel,
                               smoothing=float(smoothing),
                               padding_idx=int(padding_idx))

    block_bytes = tile_n * V * bpe
    # double-buffered input + MXU-rowsum intermediate + headroom; safe on v7x's 64 MiB/TC.
    vmem_limit = int(min(max(4 * block_bytes + tile_n * 128 * 4 + (4 << 20), 16 << 20),
                         48 << 20))

    partials = pl.pallas_call(
        kernel,
        out_shape=jax.ShapeDtypeStruct((C, tile_n, 1), jnp.float32),
        grid_spec=pltpu.PrefetchScalarGridSpec(
            num_scalar_prefetch=0,
            grid=(C, T),
            in_specs=[
                pl.BlockSpec((tile_n, V), lambda c, i: (c * T + i, 0)),
                pl.BlockSpec((tile_n, 1), lambda c, i: (c * T + i, 0)),
            ],
            out_specs=pl.BlockSpec((1, tile_n, 1), lambda c, i: (c, 0, 0)),
        ),
        compiler_params=pltpu.CompilerParams(
            # TODO(synk): on v7x, evaluate pltpu.CORE_PARALLEL for the chunk axis
            # if "parallel" does not shard across the two TensorCores.
            dimension_semantics=("parallel", "arbitrary"),
            vmem_limit_bytes=vmem_limit,
        ),
        cost_estimate=pl.CostEstimate(
            flops=8 * N_padded * V,
            transcendentals=0,
            bytes_accessed=N_padded * V * bpe + N_padded * 4 + C * tile_n * 4,
        ),
    )(x, tgt2d)
    # Tiny final reduce over (C, tile_n, 1) partials done outside the kernel.
    return jnp.sum(partials)


def _reference(model_output, target, padding_idx, smoothing):
    N, V = model_output.shape
    base = smoothing / (V - 1)
    confidence = 1.0 - smoothing
    col = jnp.arange(V)[None, :]
    s = jnp.full((N, V), base, jnp.float32)
    s = jnp.where(col == target[:, None], confidence, s)
    s = jnp.where(col == padding_idx, 0.0, s)
    xlogy = jnp.where(s > 0, s * jnp.log(jnp.where(s > 0, s, 1.0)), 0.0)
    return jnp.sum(xlogy - s * model_output.astype(jnp.float32))


if __name__ == "__main__":
    padding_idx = 0
    smoothing = 0.1
    key = jax.random.PRNGKey(0)

    cases = [
        # (N, V, dtype, rtol, atol)
        (10, 32, jnp.float32, 1e-3, 1e-3),     # tiny; N not a multiple of the tile
        (24, 640, jnp.float32, 1e-3, 1e-3),    # wider vocab; exercises MXU row-sum path
        (30, 640, jnp.bfloat16, 8e-3, 8e-3),   # bf16 path (16-row tile alignment)
    ]
    for idx, (N, V, dtype, rtol, atol) in enumerate(cases):
        key, k1, k2 = jax.random.split(key, 3)
        logits = jax.random.normal(k1, (N, V), dtype=jnp.float32)
        model_output = jax.nn.log_softmax(logits, axis=-1).astype(dtype)  # log-probs
        target = jax.random.randint(k2, (N,), 0, V, dtype=jnp.int32)
        target = target.at[3].set(padding_idx)     # exercise target == padding_idx path

        loss = label_smoothing_loss(model_output, target,
                                    padding_idx=padding_idx, smoothing=smoothing)
        loss = jax.block_until_ready(loss)
        ref = _reference(model_output, target, padding_idx, smoothing)
        assert jnp.allclose(loss, ref, rtol=rtol, atol=atol), (idx, loss, ref)

    print("KERNEL_OK")
</pallas_src>

<mosaic_0001>
module attributes {stable_mosaic.version = 11 : i64} {
  func.func @_label_smoothing_kernel(%arg0: i32, %arg1: i32, %arg2: memref<16x32xf32, #tpu.memory_space<vmem>>, %arg3: memref<16x1xi32, #tpu.memory_space<vmem>>, %arg4: memref<1x16x1xf32, #tpu.memory_space<vmem>>) attributes {dimension_semantics = [#tpu.dimension_semantics<parallel>, #tpu.dimension_semantics<arbitrary>], iteration_bounds = array<i64: 1, 1>, scalar_prefetch = 0 : i64, scratch_operands = 0 : i64, tpu.core_type = #tpu.core_type<tc>, window_params = [{transform_indices = @transform_0, window_bounds = array<i64: 16, 32>}, {transform_indices = @transform_1, window_bounds = array<i64: 16, 1>}, {transform_indices = @transform_2, window_bounds = array<i64: 1, 16, 1>}]} {
    %c0_i32 = arith.constant 0 : i32
    %0 = arith.cmpi eq, %arg1, %c0_i32 : i32
    %1 = arith.extui %0 : i1 to i32
    %c0_i32_0 = arith.constant 0 : i32
    %2 = arith.cmpi ne, %1, %c0_i32_0 : i32
    scf.if %2 {
      %cst_22 = arith.constant 0.000000e+00 : f32
      %40 = vector.broadcast %cst_22 : f32 to vector<1x16x1xf32>
      %c0_23 = arith.constant 0 : index
      %c0_24 = arith.constant 0 : index
      %c0_25 = arith.constant 0 : index
      %41 = vector.load %arg4[%c0_23, %c0_24, %c0_25] : memref<1x16x1xf32, #tpu.memory_space<vmem>>, vector<1x16x1xf32>
      tpu.vector_store %arg4[%c0_23, %c0_24, %c0_25], %40 {strides = array<i32>} : memref<1x16x1xf32, #tpu.memory_space<vmem>>, vector<1x16x1xf32>,
    } else {
    }
    %c0 = arith.constant 0 : index
    %c0_1 = arith.constant 0 : index
    %3 = vector.load %arg2[%c0, %c0_1] : memref<16x32xf32, #tpu.memory_space<vmem>>, vector<16x32xf32>
    %c0_2 = arith.constant 0 : index
    %c0_3 = arith.constant 0 : index
    %4 = vector.load %arg3[%c0_2, %c0_3] : memref<16x1xi32, #tpu.memory_space<vmem>>, vector<16x1xi32>
    %cst = arith.constant 1.000000e+00 : f32
    %5 = vector.broadcast %cst : f32 to vector<32x128xf32>
    %cst_4 = arith.constant dense<0.000000e+00> : vector<16x128xf32>
    %6 = tpu.matmul %3, %5, %cst_4 {dimension_numbers = #tpu.dot_dimension_numbers<[1], [0], [0], [1], [0, 0, 1, 1], [], []>} : vector<16x32xf32>, vector<32x128xf32>, vector<16x128xf32> -> vector<16x128xf32>
    %7 = vector.extract_strided_slice %6 {offsets = [0, 0], sizes = [16, 1], strides = [1, 1]} : vector<16x128xf32> to vector<16x1xf32>
    %8 = tpu.iota {dimensions = array<i32: 1>} : vector<16x32xi32>
    %9 = vector.broadcast %4 : vector<16x1xi32> to vector<16x32xi32>
    %10 = arith.cmpi eq, %8, %9 : vector<16x32xi32>
    %cst_5 = arith.constant 0.000000e+00 : f32
    %11 = vector.broadcast %cst_5 : f32 to vector<16x32xf32>
    %12 = arith.select %10, %3, %11 : vector<16x32xi1>, vector<16x32xf32>
    %cst_6 = arith.constant dense<0.000000e+00> : vector<16xf32>
    %13 = vector.multi_reduction <add>, %12, %cst_6 [1] : vector<16x32xf32> to vector<16xf32>
    %14 = vector.shape_cast %13 : vector<16xf32> to vector<16x1xf32>
    %15 = vector.extract_strided_slice %3 {offsets = [0, 0], sizes = [16, 1], strides = [1, 1]} : vector<16x32xf32> to vector<16x1xf32>
    %c0_i32_7 = arith.constant 0 : i32
    %16 = vector.broadcast %c0_i32_7 : i32 to vector<16x1xi32>
    %17 = arith.cmpi eq, %4, %16 : vector<16x1xi32>
    %cst_8 = arith.constant 0.0032258064 : f32
    %18 = vector.broadcast %cst_8 : f32 to vector<16x1xf32>
    %19 = arith.mulf %18, %7 : vector<16x1xf32>
    %cst_9 = arith.constant 0.0032258064 : f32
    %20 = vector.broadcast %cst_9 : f32 to vector<16x1xf32>
    %21 = arith.mulf %20, %15 : vector<16x1xf32>
    %22 = arith.subf %19, %21 : vector<16x1xf32>
    %cst_10 = arith.constant 0.896774172 : f32
    %23 = vector.broadcast %cst_10 : f32 to vector<16x1xf32>
    %24 = arith.mulf %23, %14 : vector<16x1xf32>
    %cst_11 = arith.constant 0.000000e+00 : f32
    %25 = vector.broadcast %cst_11 : f32 to vector<16x1xf32>
    %26 = arith.select %17, %25, %24 : vector<16x1xi1>, vector<16x1xf32>
    %27 = arith.addf %22, %26 : vector<16x1xf32>
    %c0_i32_12 = arith.constant 0 : i32
    %28 = vector.broadcast %c0_i32_12 : i32 to vector<16x1xi32>
    %29 = arith.cmpi slt, %4, %28 : vector<16x1xi32>
    %cst_13 = arith.constant -0.573657215 : f32
    %cst_14 = arith.constant -0.649976611 : f32
    %30 = vector.broadcast %cst_13 : f32 to vector<16x1xf32>
    %31 = vector.broadcast %cst_14 : f32 to vector<16x1xf32>
    %32 = arith.select %17, %30, %31 : vector<16x1xi1>, vector<16x1xf32>
    %cst_15 = arith.constant 0.000000e+00 : f32
    %33 = vector.broadcast %cst_15 : f32 to vector<16x1xf32>
    %34 = arith.select %29, %33, %32 : vector<16x1xi1>, vector<16x1xf32>
    %c0_16 = arith.constant 0 : index
    %c0_17 = arith.constant 0 : index
    %c0_18 = arith.constant 0 : index
    %35 = vector.load %arg4[%c0_16, %c0_17, %c0_18] : memref<1x16x1xf32, #tpu.memory_space<vmem>>, vector<1x16x1xf32>
    %36 = arith.subf %34, %27 : vector<16x1xf32>
    %37 = vector.shape_cast %36 : vector<16x1xf32> to vector<1x16x1xf32>
    %38 = arith.addf %35, %37 : vector<1x16x1xf32>
    %c0_19 = arith.constant 0 : index
    %c0_20 = arith.constant 0 : index
    %c0_21 = arith.constant 0 : index
    %39 = vector.load %arg4[%c0_19, %c0_20, %c0_21] : memref<1x16x1xf32, #tpu.memory_space<vmem>>, vector<1x16x1xf32>
    tpu.vector_store %arg4[%c0_19, %c0_20, %c0_21], %38 {strides = array<i32>} : memref<1x16x1xf32, #tpu.memory_space<vmem>>, vector<1x16x1xf32>,
    return
  }
  func.func @transform_0(%arg0: i32, %arg1: i32) -> (i32, i32) {
    %c1_i32 = arith.constant 1 : i32
    %0 = arith.muli %arg0, %c1_i32 : i32
    %1 = arith.addi %0, %arg1 : i32
    %c0_i32 = arith.constant 0 : i32
    %c0_i32_0 = arith.constant 0 : i32
    return %1, %c0_i32 : i32, i32
  }
  func.func @transform_1(%arg0: i32, %arg1: i32) -> (i32, i32) {
    %c1_i32 = arith.constant 1 : i32
    %0 = arith.muli %arg0, %c1_i32 : i32
    %1 = arith.addi %0, %arg1 : i32
    %c0_i32 = arith.constant 0 : i32
    %c0_i32_0 = arith.constant 0 : i32
    return %1, %c0_i32 : i32, i32
  }
  func.func @transform_2(%arg0: i32, %arg1: i32) -> (i32, i32, i32) {
    %c0_i32 = arith.constant 0 : i32
    %c0_i32_0 = arith.constant 0 : i32
    %c0_i32_1 = arith.constant 0 : i32
    return %arg0, %c0_i32, %c0_i32_0 : i32, i32, i32
  }
}

</mosaic_0001>

<llo_original>
// kernel: tpu_custom_call.1
$region0: #{tpu_custom_call.1}
  #allocation0 [shape = 'u32[]', space=smem, size = 0x4, offset = 0x4, fixed_abs, tag = 'smem constant byte address 0x4 - core index']
  #allocation1 [shape = 'u32[144,128]{1,0:T(1,128)}', space=vmem, size = 0x12000, scoped, tag = 'internal scratch']
  %s0 = inlined_call_operand.vmem [shape: f32[16,32], index: 0, kind: input, shape index: {}]
  %s1 = inlined_call_operand.vmem [shape: s32[16,1], index: 1, kind: input, shape index: {}]
  %s2 = inlined_call_operand.vmem [shape: f32[1,16,1], index: 2, kind: output, shape index: {}]
  %s3 = sld [smem:[#allocation0]]
  $region22: #{tpu_custom_call.1} parent=0
    _
  %s5 = ssub.s32 1, %s3
  %s6 = scalar_select 0, %s5, %s3
  // Predicated region
  $region2: #{tpu_custom_call.1} parent=0 // pred_check
    _
  $region3: #{tpu_custom_call.1} parent=0 // pred_check_branch
    %8 = sbr.rel (0) target = $region5
  $region4: #{tpu_custom_call.1} parent=0 // pred_region
    %s9 = sadd.s32 0, 0
    %s10 = smul.u32 2, %s9
    %p11 = scmp.lt.s32.totalorder %s10, 1
    %s12 = scalar_select %p11, %s10, 1
    %s13 = smul.addr %s12, 8
    %s14 = scalar_lea.vmem %s0, %s13
    %s15 = sadd.s32 0, 0
    %s16 = smul.u32 2, %s15
  $region5: #{tpu_custom_call.1} parent=0 // pred_fallthru
    _
  // Predicated region
  $region6: #{tpu_custom_call.1} parent=0 // pred_check
    _
  $region7: #{tpu_custom_call.1} parent=0 // pred_check_branch
    %18 = sbr.rel (0) target = $region9
  $region8: #{tpu_custom_call.1} parent=0 // pred_region
    %s19 = sadd.s32 0, 0
    %s20 = smul.u32 2, %s19
    %p21 = scmp.lt.s32.totalorder %s20, 1
    %s22 = scalar_select %p21, %s20, 1
    %s23 = smul.addr %s22, 8
    %s24 = scalar_lea.vmem %s1, %s23
    %s25 = sadd.s32 0, 0
    %s26 = smul.u32 2, %s25
  $region9: #{tpu_custom_call.1} parent=0 // pred_fallthru
    _
  %s27 = sadd.s32 0, 0
  %s28 = smul.u32 2, %s27
  %p29 = scmp.lt.s32.totalorder %s28, 1
  %s30 = scalar_select %p29, %s28, 1
  %s31 = smul.addr %s30, 8
  %s32 = scalar_lea.vmem %s0, %s31
  %s33 = sadd.s32 0, 0
  %s34 = smul.u32 2, %s33
  %p35 = scmp.lt.s32.totalorder %s34, 1
  %s36 = scalar_select %p35, %s34, 1
  %s37 = smul.addr %s36, 8
  %s38 = scalar_lea.vmem %s1, %s37
  %s39 = sadd.s32 0, 0
  %s40 = smul.u32 2, %s39
  %p41 = scmp.lt.s32.totalorder %s40, 1
  %s42 = scalar_select %p41, %s40, 1
  %s43 = smul.addr %s42, 8
  %s44 = scalar_lea.vmem %s0, %s43
  %s45 = sadd.s32 0, 0
  %s46 = smul.u32 2, %s45
  %s47 = sadd.s32 0, 0
  %s48 = smul.u32 2, %s47
  %p49 = scmp.lt.s32.totalorder %s48, 1
  %s50 = scalar_select %p49, %s48, 1
  %s51 = smul.addr %s50, 8
  %s52 = scalar_lea.vmem %s1, %s51
  %s53 = sadd.s32 0, 0
  %s54 = smul.u32 2, %s53
  %p55 = scmp.eq.s32.totalorder 0, 0
  // Predicated region
  $region10: #{tpu_custom_call.1} parent=0 // pred_check
    %p56 = pneg %p55
  $region11: #{tpu_custom_call.1} parent=0 // pred_check_branch
    %58 = sbr.rel (%p56) target = $region13
  $region12: #{tpu_custom_call.1} parent=0 // pred_region
    %vm59 = vcmask 7168
    %60 = vst.msk [vmem:[%s2] sm:$0xff] %vm59, 0.0
    %61 = vst.msk [vmem:[%s2 + $0x8] sm:$0xff] %vm59, 0.0
  $region13: #{tpu_custom_call.1} parent=0 // pred_fallthru
    _
  %v62 = vld [vmem:[%s44] sm:$0xff]
  %v63 = vld [vmem:[%s44 + $0x8] sm:$0xff]
  %v64 = vld [vmem:[%s52] sm:$0xff]
  %v65 = vld [vmem:[%s52 + $0x8] sm:$0xff]
  %vm66 = vcmask 261120
  %v68 = vsel %vm66, %v62, 0
  %v71 = vsel %vm66, %v63, 0
  %73 = vmatprep.subr.mxu0 0.0
  %74 = vmatpush1.msra.mxu0 0.0
  %75 = vmatprep.subr.mxu0 0.0
  %76 = vmatpush1.msra.mxu0 0.0
  %77 = vmatprep.subr.mxu0 0.0
  %78 = vmatpush1.msra.mxu0 0.0
  %79 = vmatprep.subr.mxu0 0.0
  %80 = vmatpush1.msra.mxu0 0.0
  %81 = vmatprep.subr.mxu0 0.0
  %82 = vmatpush1.msra.mxu0 0.0
  %83 = vmatprep.subr.mxu0 0.0
  %84 = vmatpush1.msra.mxu0 0.0
  %85 = vmatprep.subr.mxu0 0.0
  %86 = vmatpush1.msra.mxu0 0.0
  %87 = vmatprep.subr.mxu0 0.0
  %88 = vmatpush1.msra.mxu0 0.0
  %89 = vmatprep.subr.mxu0 0.0
  %90 = vmatpush1.msra.mxu0 0.0
  %91 = vmatprep.subr.mxu0 0.0
  %92 = vmatpush1.msra.mxu0 0.0
  %93 = vmatprep.subr.mxu0 0.0
  %94 = vmatpush1.msra.mxu0 0.0
  %95 = vmatprep.subr.mxu0 0.0
  %96 = vmatpush1.msra.mxu0 0.0
  %97 = vmatprep.subr.mxu0 0.0
  %98 = vmatpush1.msra.mxu0 1.0
  %99 = vmatprep.subr.mxu0 0.0
  %100 = vmatpush1.msra.mxu0 1.0
  %101 = vmatprep.subr.mxu0 0.0
  %102 = vmatpush1.msra.mxu0 1.0
  %103 = vmatprep.subr.mxu0 0.0
  %104 = vmatpush1.msra.mxu0 1.0
  %105 = vmatprep.subr.mxu0 0.0
  %106 = vmatpush2.msra.mxu0 0.0
  %107 = vmatprep.subr.mxu0 0.0
  %108 = vmatpush2.msra.mxu0 0.0
  %109 = vmatprep.subr.mxu0 0.0
  %110 = vmatpush2.msra.mxu0 0.0
  %111 = vmatprep.subr.mxu0 0.0
  %112 = vmatpush2.msra.mxu0 0.0
  %113 = vmatprep.subr.mxu0 0.0
  %114 = vmatpush2.msra.mxu0 0.0
  %115 = vmatprep.subr.mxu0 0.0
  %116 = vmatpush2.msra.mxu0 0.0
  %117 = vmatprep.subr.mxu0 0.0
  %118 = vmatpush2.msra.mxu0 0.0
  %119 = vmatprep.subr.mxu0 0.0
  %120 = vmatpush2.msra.mxu0 0.0
  %121 = vmatprep.subr.mxu0 0.0
  %122 = vmatpush2.msra.mxu0 0.0
  %123 = vmatprep.subr.mxu0 0.0
  %124 = vmatpush2.msra.mxu0 0.0
  %125 = vmatprep.subr.mxu0 0.0
  %126 = vmatpush2.msra.mxu0 0.0
  %127 = vmatprep.subr.mxu0 0.0
  %128 = vmatpush2.msra.mxu0 0.0
  %129 = vmatprep.subr.mxu0 0.0
  %130 = vmatpush2.msra.mxu0 0.0
  %131 = vmatprep.subr.mxu0 0.0
  %132 = vmatpush2.msra.mxu0 0.0
  %133 = vmatprep.subr.mxu0 0.0
  %134 = vmatpush2.msra.mxu0 0.0
  %135 = vmatprep.subr.mxu0 0.0
  %136 = vmatpush2.msra.mxu0 0.0
  %137 = vmatprep.mubr.f32.mxu0 0.0
  %138 = vmatmul.mubr.f32.gmra.mxu0 %v68
  %v139 = vpop.f32.mrf.mxu0
  %v140 = vadd.f32 0.0, %v139
  %v141 = vpop.f32.mrf.mxu0
  %142 = vmatprep.mubr.f32.mxu0 0.0
  %143 = vmatmul.mubr.f32.gmra.mxu0 %v71
  %v144 = vpop.f32.mrf.mxu0
  %v145 = vadd.f32 0.0, %v144
  %v146 = vpop.f32.mrf.mxu0
  %147 = vdwg.mxu0
  %v148 = vlaneseq
  %v149 = vand.u32 %v148, 127
  %150 = vset.pattern.permute.xlu0 0
  %151 = vperm.xlu0 %150, %v64
  %v152 = vpop.permute.xlu0 %151
  %153 = vset.pattern.permute.xlu0 0
  %154 = vperm.xlu0 %153, %v65
  %v155 = vpop.permute.xlu0 %154
  %vm156 = vcmp.eq.s32.totalorder %v149, %v152
  %vm157 = vcmp.eq.s32.totalorder %v149, %v155
  %v158 = vsel %vm156, %v62, 0.0
  %v159 = vsel %vm157, %v63, 0.0
  %v160 = vsel %vm66, %v158, 0.0
  %161 = vadd.xlane.f32.xlu0 %v160
  %v162 = vpop.xlane.xlu0 %161
  %v163 = vsel %vm66, %v159, 0.0
  %164 = vadd.xlane.f32.xlu0 %v163
  %v165 = vpop.xlane.xlu0 %164
  %vm166 = vcmp.eq.s32.totalorder %v64, 0
  %vm167 = vcmp.eq.s32.totalorder %v65, 0
  %v168 = vmul.f32 %v140, 0.0032258064
  %v169 = vmul.f32 %v145, 0.0032258064
  %v170 = vmul.f32 %v62, 0.0032258064
  %v171 = vmul.f32 %v63, 0.0032258064
  %v172 = vsub.f32 %v168, %v170
  %v173 = vsub.f32 %v169, %v171
  %v174 = vmul.f32 %v162, 0.8967742
  %v175 = vmul.f32 %v165, 0.8967742
  %v176 = vsel %vm166, 0.0, %v174
  %v177 = vsel %vm167, 0.0, %v175
  %v178 = vadd.f32 %v172, %v176
  %v179 = vadd.f32 %v173, %v177
  %vm180 = vcmp.lt.s32.totalorder %v64, 0
  %vm181 = vcmp.lt.s32.totalorder %v65, 0
  %v182 = vsel %vm166, -0.5736572, -0.6499766
  %v183 = vsel %vm167, -0.5736572, -0.6499766
  %v184 = vsel %vm180, 0.0, %v182
  %v185 = vsel %vm181, 0.0, %v183
  %v186 = vld [vmem:[%s2] sm:$0xff]
  %v187 = vld [vmem:[%s2 + $0x8] sm:$0xff]
  %v188 = vsub.f32 %v184, %v178
  %v189 = vsub.f32 %v185, %v179
  %v190 = vadd.f32 %v186, %v188
  %v191 = vadd.f32 %v187, %v189
  %vm192 = vcmask 7168
  %193 = vst.msk [vmem:[%s2] sm:$0xff] %vm192, %v190
  %194 = vst.msk [vmem:[%s2 + $0x8] sm:$0xff] %vm192, %v191
  // Predicated region
  $region14: #{tpu_custom_call.1} parent=0 // pred_check
    _
  $region15: #{tpu_custom_call.1} parent=0 // pred_check_branch
    %196 = sbr.rel (0) target = $region17
  $region16: #{tpu_custom_call.1} parent=0 // pred_region
    _
  $region17: #{tpu_custom_call.1} parent=0 // pred_fallthru
    _
  // Predicated region
  $region18: #{tpu_custom_call.1} parent=0 // pred_check
    _
  $region19: #{tpu_custom_call.1} parent=0 // pred_check_branch
    %198 = sbr.rel (0) target = $region21
  $region20: #{tpu_custom_call.1} parent=0 // pred_region
    _
  $region21: #{tpu_custom_call.1} parent=0 // pred_fallthru
    _

</llo_original>
